<compile_context>
chip_gen: v7x
topology: tpu7x:2x2x1
jax: 0.10.0
libtpu: 0.0.40
codegen_flags: <defaults>
</compile_context>

<pallas_src>
import jax
import jax.numpy as jnp
from jax.experimental import pallas as pl
from jax.experimental.pallas import tpu as pltpu

D_IN, D_HID, D_OUT = 100, 100, 50
D_PAD = 128            # lane-dense width for hidden / output features
TILE_M_MAX = 1024      # batch rows per grid step for large batches
SPLIT_THRESHOLD = 1024 # above this many (padded) rows, use >= 2 tiles (v7x megacore)


def _round_up(n, m):
    return ((n + m - 1) // m) * m


def _choose_tile_m(B):
    b8 = _round_up(B, 8)
    if b8 <= SPLIT_THRESHOLD:
        return b8                                    # single tile, grid = 1
    # >= 2 tiles so both v7x TensorCores get work and DMA overlaps compute,
    # each tile still >= 512 rows so we sit near the HBM roofline.
    return min(TILE_M_MAX, _round_up(pl.cdiv(b8, 2), 8))


def mlp_kernel(x_ref, w1_ref, b1_ref, w2_ref, b2_ref, o_ref):
    # In-kernel cast to the matmul dtype (no-op for f32 weights, bf16 for bf16 weights).
    x = x_ref[...].astype(w1_ref.dtype)
    # net1: x @ W1 on the MXU, f32 accumulation.  K = 100 is handled by MXU masking.
    h = jnp.dot(x, w1_ref[...], preferred_element_type=jnp.float32)
    # bias + ReLU in f32 (v5e VPU has no bf16 path; padded lanes stay exactly 0).
    h = jnp.maximum(h + b1_ref[...], 0.0)
    # net2: h @ W2 (+ b2).
    y = jnp.dot(h.astype(w2_ref.dtype), w2_ref[...],
                preferred_element_type=jnp.float32)
    o_ref[...] = (y + b2_ref[...]).astype(o_ref.dtype)


def prepare_params(w1, b1, w2, b2, matmul_dtype=jnp.float32):
    """One-time parameter prep (call once, reuse every forward).
    Weights become [in, out], zero-padded on the out (and hidden-in) axis to 128,
    in `matmul_dtype`; biases become f32 [1, 128] rows (zero in the padded tail)."""
    w1_p = jnp.zeros((D_IN, D_PAD), matmul_dtype).at[:, :D_HID].set(
        w1.T.astype(matmul_dtype))
    w2_p = jnp.zeros((D_PAD, D_PAD), matmul_dtype).at[:D_HID, :D_OUT].set(
        w2.T.astype(matmul_dtype))
    b1_p = jnp.zeros((1, D_PAD), jnp.float32).at[0, :D_HID].set(
        b1.astype(jnp.float32))
    b2_p = jnp.zeros((1, D_PAD), jnp.float32).at[0, :D_OUT].set(
        b2.astype(jnp.float32))
    return w1_p, b1_p, w2_p, b2_p


@jax.jit
def toy_model_forward(x, w1_p, b1_p, w2_p, b2_p):
    """x: [B, 100] float32 (unpadded). Params must come from prepare_params()."""
    B = x.shape[0]
    tile_m = _choose_tile_m(B)
    grid = (pl.cdiv(B, tile_m),)

    w_item = jnp.dtype(w1_p.dtype).itemsize
    flops = 2 * B * D_IN * D_HID + 2 * B * D_HID * D_OUT
    bytes_accessed = (
        B * D_IN * 4                                     # x (read as-is, no pad pass)
        + (D_IN * D_PAD + D_PAD * D_PAD) * w_item        # W1, W2 (resident)
        + 2 * D_PAD * 4                                  # b1, b2
        + B * D_PAD * 4)                                 # out

    out = pl.pallas_call(
        mlp_kernel,
        out_shape=jax.ShapeDtypeStruct((B, D_PAD), jnp.float32),
        grid_spec=pltpu.PrefetchScalarGridSpec(
            num_scalar_prefetch=0,
            grid=grid,
            in_specs=[
                # x tiled on batch; last dim = full array dim (100) -> legal block.
                pl.BlockSpec((tile_m, D_IN), lambda i: (i, 0)),
                pl.BlockSpec((D_IN, D_PAD), lambda i: (0, 0)),    # W1: resident
                pl.BlockSpec((1, D_PAD), lambda i: (0, 0)),       # b1: resident
                pl.BlockSpec((D_PAD, D_PAD), lambda i: (0, 0)),   # W2: resident
                pl.BlockSpec((1, D_PAD), lambda i: (0, 0)),       # b2: resident
            ],
            out_specs=pl.BlockSpec((tile_m, D_PAD), lambda i: (i, 0)),
        ),
        compiler_params=pltpu.CompilerParams(
            dimension_semantics=("parallel",)),   # shard batch tiles across TCs
        cost_estimate=pl.CostEstimate(
            flops=flops, bytes_accessed=bytes_accessed, transcendentals=0),
    )(x, w1_p, b1_p, w2_p, b2_p)

    # Lane padding (cols 50..127) is exactly zero; consumers that accept the
    # padded slab can take `out` directly and skip this slice.
    return out[:, :D_OUT]


def _init_linear(key, out_features, in_features):
    # Deterministic init mimicking nn.Linear's default U(-1/sqrt(fan_in), 1/sqrt(fan_in)).
    kw, kb = jax.random.split(key)
    bound = 1.0 / jnp.sqrt(jnp.float32(in_features))
    w = jax.random.uniform(kw, (out_features, in_features), jnp.float32, -bound, bound)
    b = jax.random.uniform(kb, (out_features,), jnp.float32, -bound, bound)
    return w, b


if __name__ == "__main__":
    key = jax.random.PRNGKey(0)
    k_x, k_l1, k_l2 = jax.random.split(key, 3)

    batch = 8
    x = jax.random.normal(k_x, (batch, D_IN), jnp.float32)
    w1, b1 = _init_linear(k_l1, D_HID, D_IN)
    w2, b2 = _init_linear(k_l2, D_OUT, D_HID)

    # Pure-JAX reference (matches nn.Linear semantics: x @ W.T + b).
    ref = jnp.maximum(x @ w1.T + b1, 0.0) @ w2.T + b2

    # f32 MXU path --------------------------------------------------------------
    params_f32 = prepare_params(w1, b1, w2, b2, matmul_dtype=jnp.float32)
    out = jax.block_until_ready(toy_model_forward(x, *params_f32))
    assert out.shape == (batch, D_OUT)
    assert jnp.allclose(out, ref, atol=1e-5, rtol=1e-5)

    # bf16 weights, in-kernel activation cast, f32 accumulation (all generations) -
    params_bf16 = prepare_params(w1, b1, w2, b2, matmul_dtype=jnp.bfloat16)
    out_bf16 = jax.block_until_ready(toy_model_forward(x, *params_bf16))
    assert out_bf16.shape == (batch, D_OUT)
    assert jnp.allclose(out_bf16, ref, atol=5e-2, rtol=5e-2)

    # Non-multiple-of-8 batch exercises the ragged-tile path (OOB writes dropped).
    x13 = jax.random.normal(k_x, (13, D_IN), jnp.float32)
    ref13 = jnp.maximum(x13 @ w1.T + b1, 0.0) @ w2.T + b2
    out13 = jax.block_until_ready(toy_model_forward(x13, *params_f32))
    assert out13.shape == (13, D_OUT)
    assert jnp.allclose(out13, ref13, atol=1e-5, rtol=1e-5)

    print("KERNEL_OK")
</pallas_src>

<mosaic_0001>
module attributes {stable_mosaic.version = 11 : i64} {
  func.func @mlp_kernel(%arg0: i32, %arg1: memref<8x100xf32, #tpu.memory_space<vmem>>, %arg2: memref<100x128xf32, #tpu.memory_space<vmem>>, %arg3: memref<1x128xf32, #tpu.memory_space<vmem>>, %arg4: memref<128x128xf32, #tpu.memory_space<vmem>>, %arg5: memref<1x128xf32, #tpu.memory_space<vmem>>, %arg6: memref<8x128xf32, #tpu.memory_space<vmem>>) attributes {dimension_semantics = [#tpu.dimension_semantics<parallel>], iteration_bounds = array<i64: 1>, scalar_prefetch = 0 : i64, scratch_operands = 0 : i64, tpu.core_type = #tpu.core_type<tc>, window_params = [{transform_indices = @transform_0, window_bounds = array<i64: 8, 100>}, {pipeline_mode = #tpu.pipeline_mode<synchronous>, transform_indices = @transform_1, window_bounds = array<i64: 100, 128>}, {pipeline_mode = #tpu.pipeline_mode<synchronous>, transform_indices = @transform_2, window_bounds = array<i64: 1, 128>}, {pipeline_mode = #tpu.pipeline_mode<synchronous>, transform_indices = @transform_3, window_bounds = array<i64: 128, 128>}, {pipeline_mode = #tpu.pipeline_mode<synchronous>, transform_indices = @transform_4, window_bounds = array<i64: 1, 128>}, {transform_indices = @transform_5, window_bounds = array<i64: 8, 128>}]} {
    %c0 = arith.constant 0 : index
    %c0_0 = arith.constant 0 : index
    %0 = vector.load %arg1[%c0, %c0_0] : memref<8x100xf32, #tpu.memory_space<vmem>>, vector<8x100xf32>
    %c0_1 = arith.constant 0 : index
    %c0_2 = arith.constant 0 : index
    %1 = vector.load %arg2[%c0_1, %c0_2] : memref<100x128xf32, #tpu.memory_space<vmem>>, vector<100x128xf32>
    %cst = arith.constant dense<0.000000e+00> : vector<8x128xf32>
    %2 = tpu.matmul %0, %1, %cst {dimension_numbers = #tpu.dot_dimension_numbers<[1], [0], [0], [1], [0, 0, 1, 1], [], []>} : vector<8x100xf32>, vector<100x128xf32>, vector<8x128xf32> -> vector<8x128xf32>
    %c0_3 = arith.constant 0 : index
    %c0_4 = arith.constant 0 : index
    %3 = vector.load %arg3[%c0_3, %c0_4] : memref<1x128xf32, #tpu.memory_space<vmem>>, vector<1x128xf32>
    %4 = vector.broadcast %3 : vector<1x128xf32> to vector<8x128xf32>
    %5 = arith.addf %2, %4 : vector<8x128xf32>
    %cst_5 = arith.constant 0.000000e+00 : f32
    %6 = vector.broadcast %cst_5 : f32 to vector<8x128xf32>
    %7 = arith.maximumf %5, %6 : vector<8x128xf32>
    %c0_6 = arith.constant 0 : index
    %c0_7 = arith.constant 0 : index
    %8 = vector.load %arg4[%c0_6, %c0_7] : memref<128x128xf32, #tpu.memory_space<vmem>>, vector<128x128xf32>
    %cst_8 = arith.constant dense<0.000000e+00> : vector<8x128xf32>
    %9 = tpu.matmul %7, %8, %cst_8 {dimension_numbers = #tpu.dot_dimension_numbers<[1], [0], [0], [1], [0, 0, 1, 1], [], []>} : vector<8x128xf32>, vector<128x128xf32>, vector<8x128xf32> -> vector<8x128xf32>
    %c0_9 = arith.constant 0 : index
    %c0_10 = arith.constant 0 : index
    %10 = vector.load %arg5[%c0_9, %c0_10] : memref<1x128xf32, #tpu.memory_space<vmem>>, vector<1x128xf32>
    %11 = vector.broadcast %10 : vector<1x128xf32> to vector<8x128xf32>
    %12 = arith.addf %9, %11 : vector<8x128xf32>
    %c0_11 = arith.constant 0 : index
    %c0_12 = arith.constant 0 : index
    %13 = vector.load %arg6[%c0_11, %c0_12] : memref<8x128xf32, #tpu.memory_space<vmem>>, vector<8x128xf32>
    tpu.vector_store %arg6[%c0_11, %c0_12], %12 {strides = array<i32>} : memref<8x128xf32, #tpu.memory_space<vmem>>, vector<8x128xf32>,
    return
  }
  func.func @transform_0(%arg0: i32) -> (i32, i32) {
    %c0_i32 = arith.constant 0 : i32
    %c0_i32_0 = arith.constant 0 : i32
    return %arg0, %c0_i32 : i32, i32
  }
  func.func @transform_1(%arg0: i32) -> (i32, i32) {
    %c0_i32 = arith.constant 0 : i32
    %c0_i32_0 = arith.constant 0 : i32
    %c0_i32_1 = arith.constant 0 : i32
    return %c0_i32, %c0_i32_0 : i32, i32
  }
  func.func @transform_2(%arg0: i32) -> (i32, i32) {
    %c0_i32 = arith.constant 0 : i32
    %c0_i32_0 = arith.constant 0 : i32
    %c0_i32_1 = arith.constant 0 : i32
    return %c0_i32, %c0_i32_0 : i32, i32
  }
  func.func @transform_3(%arg0: i32) -> (i32, i32) {
    %c0_i32 = arith.constant 0 : i32
    %c0_i32_0 = arith.constant 0 : i32
    %c0_i32_1 = arith.constant 0 : i32
    return %c0_i32, %c0_i32_0 : i32, i32
  }
  func.func @transform_4(%arg0: i32) -> (i32, i32) {
    %c0_i32 = arith.constant 0 : i32
    %c0_i32_0 = arith.constant 0 : i32
    %c0_i32_1 = arith.constant 0 : i32
    return %c0_i32, %c0_i32_0 : i32, i32
  }
  func.func @transform_5(%arg0: i32) -> (i32, i32) {
    %c0_i32 = arith.constant 0 : i32
    %c0_i32_0 = arith.constant 0 : i32
    return %arg0, %c0_i32 : i32, i32
  }
}

</mosaic_0001>

<llo_original>
// kernel: toy_model_forward.1
$region0: #{toy_model_forward.1}
  #allocation0 [shape = 'u32[]', space=smem, size = 0x4, offset = 0x4, fixed_abs, tag = 'smem constant byte address 0x4 - core index']
  #allocation1 [shape = 'u32[144,128]{1,0:T(1,128)}', space=vmem, size = 0x12000, scoped, tag = 'internal scratch']
  %s0 = inlined_call_operand.hbm [shape: f32[8,100], index: 0, kind: input, shape index: {}]
  %s1 = inlined_call_operand.hbm [shape: f32[100,128], index: 1, kind: input, shape index: {}]
  %s2 = inlined_call_operand.vmem [shape: f32[1,128], index: 2, kind: input, shape index: {}]
  %s3 = inlined_call_operand.hbm [shape: f32[128,128], index: 3, kind: input, shape index: {}]
  %s4 = inlined_call_operand.vmem [shape: f32[1,128], index: 4, kind: input, shape index: {}]
  %s5 = inlined_call_operand.hbm [shape: f32[8,128], index: 5, kind: output, shape index: {}]
  %s6 = sld [smem:[#allocation0]]
  $region42: #{toy_model_forward.1} parent=0
    _
  %s8 = ssub.s32 1, %s6
  %s9 = scalar_select 0, %s8, %s6
  $region1: #{toy_model_forward.1} parent=0
    #allocation2 [shape = 'u8[4096]{0}', space=vmem, size = 0x1000, scoped, tag = 'input window, operand 0, single buffered']
    #allocation3 [shape = 's32[1]{0}', space=sflag, size = 0x4, scoped, tag = 'scoped memory for toy_model_forward.1']
    #allocation4 [shape = 's32[1]{0}', space=sflag, size = 0x4, scoped, tag = 'scoped memory for toy_model_forward.1']
    #allocation5 [shape = 'u8[53248]{0}', space=vmem, size = 0xd000, scoped, tag = 'input window, operand 1, single buffered']
    #allocation6 [shape = 's32[1]{0}', space=sflag, size = 0x4, scoped, tag = 'scoped memory for toy_model_forward.1']
    #allocation7 [shape = 'u8[65536]{0}', space=vmem, size = 0x10000, scoped, tag = 'input window, operand 3, single buffered']
    #allocation8 [shape = 'u8[4096]{0}', space=vmem, size = 0x1000, scoped, tag = 'output window, operand 0, single buffered']
    %10 = vsyncpa [#allocation3], 0
    %11 = vsyncpa [#allocation6], 0
    %12 = vsyncpa [#allocation4], 0
    // Predicated region
    $region2: #{toy_model_forward.1} parent=1 // pred_check
      _
    $region3: #{toy_model_forward.1} parent=1 // pred_check_branch
      %14 = sbr.rel (0) target = $region5
    $region4: #{toy_model_forward.1} parent=1 // pred_region
      %s16 = ssub.s32 128, 128
      %17 = vsyncadd [#allocation3], %s16
      %s19 = sshll.u32 [#allocation2], 4
      %s20 = int_to_ptr.vmem [resolvable:$true] %s19
      %22 = dma.hbm_to_vmem [thread:$0]  %s0, 128, %s20, [#allocation3]
    $region5: #{toy_model_forward.1} parent=1 // pred_fallthru
      _
    // Predicated region
    $region6: #{toy_model_forward.1} parent=1 // pred_check
      _
    $region7: #{toy_model_forward.1} parent=1 // pred_check_branch
      %24 = sbr.rel (0) target = $region9
    $region8: #{toy_model_forward.1} parent=1 // pred_region
      %s26 = ssub.s32 1664, 1664
      %27 = vsyncadd [#allocation6], %s26
      %s28 = sshll.u32 [#allocation5], 4
      %s29 = int_to_ptr.vmem [resolvable:$true] %s28
      %34 = dma.hbm_to_vmem [thread:$0]  %s1, 1664, %s29, [#allocation6], 128, 128, 8
    $region9: #{toy_model_forward.1} parent=1 // pred_fallthru
      _
    // Predicated region
    $region10: #{toy_model_forward.1} parent=1 // pred_check
      _
    $region11: #{toy_model_forward.1} parent=1 // pred_check_branch
      %36 = sbr.rel (0) target = $region13
    $region12: #{toy_model_forward.1} parent=1 // pred_region
      _
    $region13: #{toy_model_forward.1} parent=1 // pred_fallthru
      _
    // Predicated region
    $region14: #{toy_model_forward.1} parent=1 // pred_check
      _
    $region15: #{toy_model_forward.1} parent=1 // pred_check_branch
      %38 = sbr.rel (0) target = $region17
    $region16: #{toy_model_forward.1} parent=1 // pred_region
      %s40 = ssub.s32 2048, 2048
      %41 = vsyncadd [#allocation6], %s40
      %s42 = sshll.u32 [#allocation7], 4
      %s43 = int_to_ptr.vmem [resolvable:$true] %s42
      %48 = dma.hbm_to_vmem [thread:$0]  %s3, 2048, %s43, [#allocation6], 128, 128, 8
    $region17: #{toy_model_forward.1} parent=1 // pred_fallthru
      _
    // Predicated region
    $region18: #{toy_model_forward.1} parent=1 // pred_check
      _
    $region19: #{toy_model_forward.1} parent=1 // pred_check_branch
      %50 = sbr.rel (0) target = $region21
    $region20: #{toy_model_forward.1} parent=1 // pred_region
      _
    $region21: #{toy_model_forward.1} parent=1 // pred_fallthru
      _
    // Predicated region
    $region22: #{toy_model_forward.1} parent=1 // pred_check
      _
    $region23: #{toy_model_forward.1} parent=1 // pred_check_branch
      %52 = sbr.rel (0) target = $region25
    $region24: #{toy_model_forward.1} parent=1 // pred_region
      %53 = dma.done [#allocation3], 128
    $region25: #{toy_model_forward.1} parent=1 // pred_fallthru
      _
    // Predicated region
    $region26: #{toy_model_forward.1} parent=1 // pred_check
      _
    $region27: #{toy_model_forward.1} parent=1 // pred_check_branch
      %55 = sbr.rel (0) target = $region29
    $region28: #{toy_model_forward.1} parent=1 // pred_region
      %56 = dma.done [#allocation6], 1664
    $region29: #{toy_model_forward.1} parent=1 // pred_fallthru
      _
    // Predicated region
    $region30: #{toy_model_forward.1} parent=1 // pred_check
      _
    $region31: #{toy_model_forward.1} parent=1 // pred_check_branch
      %58 = sbr.rel (0) target = $region33
    $region32: #{toy_model_forward.1} parent=1 // pred_region
      %59 = dma.done [#allocation6], 2048
    $region33: #{toy_model_forward.1} parent=1 // pred_fallthru
      _
    %v60 = vld [vmem:[#allocation2] sm:$0xff]
    %v61 = vld [vmem:[#allocation5] sm:$0xff]
    %v62 = vld [vmem:[#allocation5 + $0x8] sm:$0xff]
    %v63 = vld [vmem:[#allocation5 + $0x10] sm:$0xff]
    %v64 = vld [vmem:[#allocation5 + $0x18] sm:$0xff]
    %v65 = vld [vmem:[#allocation5 + $0x20] sm:$0xff]
    %v66 = vld [vmem:[#allocation5 + $0x28] sm:$0xff]
    %v67 = vld [vmem:[#allocation5 + $0x30] sm:$0xff]
    %v68 = vld [vmem:[#allocation5 + $0x38] sm:$0xff]
    %v69 = vld [vmem:[#allocation5 + $0x40] sm:$0xff]
    %v70 = vld [vmem:[#allocation5 + $0x48] sm:$0xff]
    %v71 = vld [vmem:[#allocation5 + $0x50] sm:$0xff]
    %v72 = vld [vmem:[#allocation5 + $0x58] sm:$0xff]
    %v73 = vld [vmem:[#allocation5 + $0x60] sm:$0xf]
    %v74 = vld [vmem:[%s2] sm:$0x1]
    %v76 = vlaneseq
    %v77 = vshrl.u32 %v76, 7
    %v78 = vsub.s32 0, %v77
    %v79 = vrot.slane %v74, %v78
    %vm81 = vcmask 818176
    %v83 = vsel %vm81, %v60, 0
    %vm85 = vcmask 1043456
    %v87 = vsel %vm85, %v73, 0
    %89 = vmatprep.subr.mxu0 0.0
    %90 = vmatpush1.msra.mxu0 %v61
    %91 = vmatprep.subr.mxu0 0.0
    %92 = vmatpush1.msra.mxu0 %v62
    %93 = vmatprep.subr.mxu0 0.0
    %94 = vmatpush1.msra.mxu0 %v63
    %95 = vmatprep.subr.mxu0 0.0
    %96 = vmatpush1.msra.mxu0 %v64
    %97 = vmatprep.subr.mxu0 0.0
    %98 = vmatpush1.msra.mxu0 %v65
    %99 = vmatprep.subr.mxu0 0.0
    %100 = vmatpush1.msra.mxu0 %v66
    %101 = vmatprep.subr.mxu0 0.0
    %102 = vmatpush1.msra.mxu0 %v67
    %103 = vmatprep.subr.mxu0 0.0
    %104 = vmatpush1.msra.mxu0 %v68
    %105 = vmatprep.subr.mxu0 0.0
    %106 = vmatpush1.msra.mxu0 %v69
    %107 = vmatprep.subr.mxu0 0.0
    %108 = vmatpush1.msra.mxu0 %v70
    %109 = vmatprep.subr.mxu0 0.0
    %110 = vmatpush1.msra.mxu0 %v71
    %111 = vmatprep.subr.mxu0 0.0
    %112 = vmatpush1.msra.mxu0 %v72
    %113 = vmatprep.subr.mxu0 0.0
    %114 = vmatpush1.msra.mxu0 %v87
    %115 = vmatprep.subr.mxu0 0.0
    %116 = vmatpush1.msra.mxu0 0.0
    %117 = vmatprep.subr.mxu0 0.0
    %118 = vmatpush1.msra.mxu0 0.0
    %119 = vmatprep.subr.mxu0 0.0
    %120 = vmatpush1.msra.mxu0 0.0
    %121 = vmatprep.subr.mxu0 0.0
    %122 = vmatpush1.msra.mxu0 0.0
    %123 = vmatprep.subr.mxu0 0.0
    %124 = vmatpush1.msra.mxu0 0.0
    %125 = vmatprep.subr.mxu0 0.0
    %126 = vmatpush1.msra.mxu0 0.0
    %127 = vmatprep.subr.mxu0 0.0
    %128 = vmatpush1.msra.mxu0 0.0
    %129 = vmatprep.subr.mxu0 0.0
    %130 = vmatpush1.msra.mxu0 0.0
    %131 = vmatprep.subr.mxu0 0.0
    %132 = vmatpush1.msra.mxu0 0.0
    %133 = vmatprep.subr.mxu0 0.0
    %134 = vmatpush1.msra.mxu0 0.0
    %135 = vmatprep.subr.mxu0 0.0
    %136 = vmatpush1.msra.mxu0 0.0
    %137 = vmatprep.subr.mxu0 0.0
    %138 = vmatpush1.msra.mxu0 0.0
    %139 = vmatprep.subr.mxu0 0.0
    %140 = vmatpush1.msra.mxu0 0.0
    %141 = vmatprep.subr.mxu0 0.0
    %142 = vmatpush1.msra.mxu0 0.0
    %143 = vmatprep.subr.mxu0 0.0
    %144 = vmatpush1.msra.mxu0 0.0
    %145 = vmatprep.subr.mxu0 0.0
    %146 = vmatpush1.msra.mxu0 0.0
    %147 = vmatprep.subr.mxu0 0.0
    %148 = vmatpush1.msra.mxu0 0.0
    %149 = vmatprep.subr.mxu0 0.0
    %150 = vmatpush1.msra.mxu0 0.0
    %151 = vmatprep.subr.mxu0 0.0
    %152 = vmatpush1.msra.mxu0 0.0
    %153 = vmatprep.mubr.f32.mxu0 0.0
    %154 = vmatmul.mubr.f32.gmra.mrb[0].mxu0 %v83
    %v155 = vpop.f32.mrb[0].mxu0
    %v156 = vadd.f32 %v79, %v155
    %v157 = vpop.f32.mrb[0].mxu0
    %158 = vdwg.mxu0
    %v159 = vmax.f32 %v156, 0.0
    %v160 = vld [vmem:[#allocation7] sm:$0xff]
    %v161 = vld [vmem:[#allocation7 + $0x8] sm:$0xff]
    %v162 = vld [vmem:[#allocation7 + $0x10] sm:$0xff]
    %v163 = vld [vmem:[#allocation7 + $0x18] sm:$0xff]
    %v164 = vld [vmem:[#allocation7 + $0x20] sm:$0xff]
    %v165 = vld [vmem:[#allocation7 + $0x28] sm:$0xff]
    %v166 = vld [vmem:[#allocation7 + $0x30] sm:$0xff]
    %v167 = vld [vmem:[#allocation7 + $0x38] sm:$0xff]
    %v168 = vld [vmem:[#allocation7 + $0x40] sm:$0xff]
    %v169 = vld [vmem:[#allocation7 + $0x48] sm:$0xff]
    %v170 = vld [vmem:[#allocation7 + $0x50] sm:$0xff]
    %v171 = vld [vmem:[#allocation7 + $0x58] sm:$0xff]
    %v172 = vld [vmem:[#allocation7 + $0x60] sm:$0xff]
    %v173 = vld [vmem:[#allocation7 + $0x68] sm:$0xff]
    %v174 = vld [vmem:[#allocation7 + $0x70] sm:$0xff]
    %v175 = vld [vmem:[#allocation7 + $0x78] sm:$0xff]
    %v176 = vld [vmem:[%s4] sm:$0x1]
    %v178 = vlaneseq
    %v179 = vshrl.u32 %v178, 7
    %v180 = vsub.s32 0, %v179
    %v181 = vrot.slane %v176, %v180
    %183 = vmatprep.subr.mxu0 0.0
    %184 = vmatpush1.msra.mxu0 %v160
    %185 = vmatprep.subr.mxu0 0.0
    %186 = vmatpush1.msra.mxu0 %v161
    %187 = vmatprep.subr.mxu0 0.0
    %188 = vmatpush1.msra.mxu0 %v162
    %189 = vmatprep.subr.mxu0 0.0
    %190 = vmatpush1.msra.mxu0 %v163
    %191 = vmatprep.subr.mxu0 0.0
    %192 = vmatpush1.msra.mxu0 %v164
    %193 = vmatprep.subr.mxu0 0.0
    %194 = vmatpush1.msra.mxu0 %v165
    %195 = vmatprep.subr.mxu0 0.0
    %196 = vmatpush1.msra.mxu0 %v166
    %197 = vmatprep.subr.mxu0 0.0
    %198 = vmatpush1.msra.mxu0 %v167
    %199 = vmatprep.subr.mxu0 0.0
    %200 = vmatpush1.msra.mxu0 %v168
    %201 = vmatprep.subr.mxu0 0.0
    %202 = vmatpush1.msra.mxu0 %v169
    %203 = vmatprep.subr.mxu0 0.0
    %204 = vmatpush1.msra.mxu0 %v170
    %205 = vmatprep.subr.mxu0 0.0
    %206 = vmatpush1.msra.mxu0 %v171
    %207 = vmatprep.subr.mxu0 0.0
    %208 = vmatpush1.msra.mxu0 %v172
    %209 = vmatprep.subr.mxu0 0.0
    %210 = vmatpush1.msra.mxu0 %v173
    %211 = vmatprep.subr.mxu0 0.0
    %212 = vmatpush1.msra.mxu0 %v174
    %213 = vmatprep.subr.mxu0 0.0
    %214 = vmatpush1.msra.mxu0 %v175
    %215 = vmatprep.subr.mxu0 0.0
    %216 = vmatpush1.msra.mxu0 0.0
    %217 = vmatprep.subr.mxu0 0.0
    %218 = vmatpush1.msra.mxu0 0.0
    %219 = vmatprep.subr.mxu0 0.0
    %220 = vmatpush1.msra.mxu0 0.0
    %221 = vmatprep.subr.mxu0 0.0
    %222 = vmatpush1.msra.mxu0 0.0
    %223 = vmatprep.subr.mxu0 0.0
    %224 = vmatpush1.msra.mxu0 0.0
    %225 = vmatprep.subr.mxu0 0.0
    %226 = vmatpush1.msra.mxu0 0.0
    %227 = vmatprep.subr.mxu0 0.0
    %228 = vmatpush1.msra.mxu0 0.0
    %229 = vmatprep.subr.mxu0 0.0
    %230 = vmatpush1.msra.mxu0 0.0
    %231 = vmatprep.subr.mxu0 0.0
    %232 = vmatpush1.msra.mxu0 0.0
    %233 = vmatprep.subr.mxu0 0.0
    %234 = vmatpush1.msra.mxu0 0.0
    %235 = vmatprep.subr.mxu0 0.0
    %236 = vmatpush1.msra.mxu0 0.0
    %237 = vmatprep.subr.mxu0 0.0
    %238 = vmatpush1.msra.mxu0 0.0
    %239 = vmatprep.subr.mxu0 0.0
    %240 = vmatpush1.msra.mxu0 0.0
    %241 = vmatprep.subr.mxu0 0.0
    %242 = vmatpush1.msra.mxu0 0.0
    %243 = vmatprep.subr.mxu0 0.0
    %244 = vmatpush1.msra.mxu0 0.0
    %245 = vmatprep.subr.mxu0 0.0
    %246 = vmatpush1.msra.mxu0 0.0
    %247 = vmatprep.mubr.f32.mxu0 0.0
    %248 = vmatmul.mubr.f32.gmra.mrb[0].mxu0 %v159
    %v249 = vpop.f32.mrb[0].mxu0
    %v250 = vadd.f32 %v181, %v249
    %v251 = vpop.f32.mrb[0].mxu0
    %252 = vdwg.mxu0
    %253 = vst [vmem:[#allocation8] sm:$0xff] %v250
    // Predicated region
    $region34: #{toy_model_forward.1} parent=1 // pred_check
      _
    $region35: #{toy_model_forward.1} parent=1 // pred_check_branch
      %255 = sbr.rel (0) target = $region37
    $region36: #{toy_model_forward.1} parent=1 // pred_region
      %s257 = ssub.s32 128, 128
      %258 = vsyncadd [#allocation4], %s257
      %s260 = sshll.u32 [#allocation8], 4
      %s261 = int_to_ptr.vmem [resolvable:$true] %s260
      %263 = dma.vmem_to_hbm [thread:$0]  %s261, 128, %s5, [#allocation4]
    $region37: #{toy_model_forward.1} parent=1 // pred_fallthru
      _
    // Predicated region
    $region38: #{toy_model_forward.1} parent=1 // pred_check
      _
    $region39: #{toy_model_forward.1} parent=1 // pred_check_branch
      %265 = sbr.rel (0) target = $region41
    $region40: #{toy_model_forward.1} parent=1 // pred_region
      %266 = dma.done [#allocation4], 128
    $region41: #{toy_model_forward.1} parent=1 // pred_fallthru
      _
    %267 = vsyncpa [#allocation3], 1
    %268 = vsyncpa [#allocation6], 1
    %269 = vsyncpa [#allocation4], 1

</llo_original>
